<compile_context>
chip_gen: v6e
topology: v6e:2x2x1
jax: 0.10.0
libtpu: 0.0.40
codegen_flags: <defaults>
</compile_context>

<pallas_src>
import math

import jax
import jax.numpy as jnp
from jax.experimental import pallas as pl
from jax.experimental.pallas import tpu as pltpu


def _round_up(x, m):
    return ((x + m - 1) // m) * m


def _erf(z):
    # Abramowitz & Stegun 7.1.26 rational approximation, |error| <= 1.5e-7.
    a1, a2, a3, a4, a5 = (0.254829592, -0.284496736, 1.421413741,
                          -1.453152027, 1.061405429)
    p = 0.3275911
    sign = jnp.where(z >= 0.0, 1.0, -1.0)
    za = jnp.abs(z)
    t = 1.0 / (1.0 + p * za)
    poly = ((((a5 * t + a4) * t + a3) * t + a2) * t + a1) * t
    return sign * (1.0 - poly * jnp.exp(-za * za))


def _gelu_exact(x):
    # PyTorch nn.GELU() default ("none"): 0.5 * x * (1 + erf(x / sqrt(2)))
    return 0.5 * x * (1.0 + _erf(x * (1.0 / math.sqrt(2.0))))


def _ffn_kernel(x_ref, w1_ref, b1_ref, w2_ref, b2_ref, o_ref):
    h_idx = pl.program_id(1)

    # Linear 1 (this hidden chunk): (bm, dim_p) @ (dim_p, bh), bf16 in / f32 acc.
    h = jnp.dot(x_ref[...], w1_ref[...], preferred_element_type=jnp.float32)
    h = _gelu_exact(h + b1_ref[...])                       # bias + exact GELU in f32
    # Dropout (p=0.0 / eval) is the identity -> nothing to do.

    # Linear 2 partial product for this hidden chunk, accumulated into the
    # VMEM-resident f32 output block.
    y = jnp.dot(h.astype(jnp.bfloat16), w2_ref[...],
                preferred_element_type=jnp.float32)

    @pl.when(h_idx == 0)
    def _():
        o_ref[...] = y + b2_ref[...]

    @pl.when(h_idx > 0)
    def _():
        o_ref[...] += y


def feed_forward(x, w1, b1, w2, b2, *, block_m=512):
    """FeedForward forward pass.

    x : (..., dim)
    w1: (hidden, dim), b1: (hidden,)   -- PyTorch nn.Linear layout (out, in)
    w2: (dim, hidden), b2: (dim,)
    Dropout (module default p=0.0, or eval mode) is the identity.
    """
    orig_shape = x.shape
    dim = orig_shape[-1]
    hidden = w1.shape[0]
    M = math.prod(orig_shape[:-1])

    dim_p = _round_up(dim, 128)
    hid_p = _round_up(hidden, 128)
    bm = min(block_m, _round_up(max(M, 1), 8))
    Mp = _round_up(M, bm)

    # Choose the hidden-chunk size bh: largest candidate whose VMEM footprint
    # (double-buffered tiles + resident output block + intermediates) fits.
    def vmem_est(bh):
        return (2 * bm * dim_p * 2            # x tiles (bf16, double-buffered)
                + 2 * dim_p * bh * 2          # W1 chunk (bf16, double-buffered)
                + 2 * bh * dim_p * 2          # W2 chunk (bf16, double-buffered)
                + 2 * bh * 4 + 2 * dim_p * 4  # biases (f32)
                + 2 * bm * dim_p * 4          # out tiles (f32)
                + bm * bh * 4 + bm * bh * 2)  # hidden intermediate (f32 + bf16 copy)

    budget = 40 * 1024 * 1024
    bh = 128
    for cand in (hid_p, 8192, 4096, 2048, 1024, 512, 256, 128):
        if cand <= hid_p and vmem_est(cand) <= budget:
            bh = cand
            break
    # TODO(synk): also tile the model dimension if dim_p alone blows the VMEM
    # budget; realistic transformer dims fit comfortably.
    hid_pp = _round_up(hid_p, bh)
    est = vmem_est(bh)
    vmem_limit = int(min(max(int(1.25 * est), 16 << 20), 64 << 20))

    # Zero-pad to lane/sublane-friendly shapes.  Zero rows/cols contribute 0 to
    # the dots and GELU(0 + 0) == 0, so padding never leaks into real outputs.
    x2 = jnp.pad(x.reshape(M, dim), ((0, Mp - M), (0, dim_p - dim)))
    w1m = jnp.pad(w1.T, ((0, dim_p - dim), (0, hid_pp - hidden)))   # (dim_p, hid_pp)
    w2m = jnp.pad(w2.T, ((0, hid_pp - hidden), (0, dim_p - dim)))   # (hid_pp, dim_p)
    b1m = jnp.pad(b1.reshape(1, -1), ((0, 0), (0, hid_pp - hidden))).astype(jnp.float32)
    b2m = jnp.pad(b2.reshape(1, -1), ((0, 0), (0, dim_p - dim))).astype(jnp.float32)

    # bf16 MXU feeds (f32 accumulation inside the kernel); halves HBM->VMEM DMA.
    x2 = x2.astype(jnp.bfloat16)
    w1m = w1m.astype(jnp.bfloat16)
    w2m = w2m.astype(jnp.bfloat16)

    out = pl.pallas_call(
        _ffn_kernel,
        out_shape=jax.ShapeDtypeStruct((Mp, dim_p), jnp.float32),
        grid_spec=pltpu.PrefetchScalarGridSpec(
            num_scalar_prefetch=0,
            grid=(Mp // bm, hid_pp // bh),
            in_specs=[
                pl.BlockSpec((bm, dim_p), lambda i, h: (i, 0)),   # x row tile (resident across h)
                pl.BlockSpec((dim_p, bh), lambda i, h: (0, h)),   # W1 hidden chunk
                pl.BlockSpec((1, bh), lambda i, h: (0, h)),       # b1 hidden chunk
                pl.BlockSpec((bh, dim_p), lambda i, h: (h, 0)),   # W2 hidden chunk
                pl.BlockSpec((1, dim_p), lambda i, h: (0, 0)),    # b2
            ],
            out_specs=pl.BlockSpec((bm, dim_p), lambda i, h: (i, 0)),  # acc, resident across h
        ),
        compiler_params=pltpu.CompilerParams(
            dimension_semantics=("parallel", "arbitrary"),
            vmem_limit_bytes=vmem_limit),
    )(x2, w1m, b1m, w2m, b2m)

    return out[:M, :dim].reshape(orig_shape).astype(x.dtype)


if __name__ == "__main__":
    key = jax.random.PRNGKey(0)
    kx, kw1, kb1, kw2, kb2 = jax.random.split(key, 5)

    B, S, DIM, HID = 2, 8, 32, 128          # small transformer-style shapes
    x = jax.random.normal(kx, (B, S, DIM), jnp.float32)

    # PyTorch nn.Linear default init: U(-1/sqrt(fan_in), 1/sqrt(fan_in))
    bnd1 = 1.0 / math.sqrt(DIM)
    w1 = jax.random.uniform(kw1, (HID, DIM), jnp.float32, -bnd1, bnd1)
    b1 = jax.random.uniform(kb1, (HID,), jnp.float32, -bnd1, bnd1)
    bnd2 = 1.0 / math.sqrt(HID)
    w2 = jax.random.uniform(kw2, (DIM, HID), jnp.float32, -bnd2, bnd2)
    b2 = jax.random.uniform(kb2, (DIM,), jnp.float32, -bnd2, bnd2)

    out = feed_forward(x, w1, b1, w2, b2)
    out = jax.block_until_ready(out)
    assert out.shape == (B, S, DIM), out.shape

    # Pure-JAX f32 reference (exact-erf GELU; dropout identity at p=0.0).
    h_ref = jax.nn.gelu(x @ w1.T + b1, approximate=False)
    ref = h_ref @ w2.T + b2
    max_err = float(jnp.max(jnp.abs(out - ref)))
    assert jnp.allclose(out, ref, atol=3e-2, rtol=3e-2), max_err

    print("KERNEL_OK")
</pallas_src>

<mosaic_0001>
module attributes {stable_mosaic.version = 11 : i64} {
  func.func @_ffn_kernel(%arg0: i32, %arg1: i32, %arg2: memref<16x128xbf16, #tpu.memory_space<vmem>>, %arg3: memref<128x128xbf16, #tpu.memory_space<vmem>>, %arg4: memref<1x128xf32, #tpu.memory_space<vmem>>, %arg5: memref<128x128xbf16, #tpu.memory_space<vmem>>, %arg6: memref<1x128xf32, #tpu.memory_space<vmem>>, %arg7: memref<16x128xf32, #tpu.memory_space<vmem>>) attributes {dimension_semantics = [#tpu.dimension_semantics<parallel>, #tpu.dimension_semantics<arbitrary>], iteration_bounds = array<i64: 1, 1>, scalar_prefetch = 0 : i64, scratch_operands = 0 : i64, tpu.core_type = #tpu.core_type<tc>, window_params = [{transform_indices = @transform_0, window_bounds = array<i64: 16, 128>}, {transform_indices = @transform_1, window_bounds = array<i64: 128, 128>}, {transform_indices = @transform_2, window_bounds = array<i64: 1, 128>}, {transform_indices = @transform_3, window_bounds = array<i64: 128, 128>}, {pipeline_mode = #tpu.pipeline_mode<synchronous>, transform_indices = @transform_4, window_bounds = array<i64: 1, 128>}, {transform_indices = @transform_5, window_bounds = array<i64: 16, 128>}]} {
    %c0 = arith.constant 0 : index
    %c0_0 = arith.constant 0 : index
    %0 = vector.load %arg2[%c0, %c0_0] : memref<16x128xbf16, #tpu.memory_space<vmem>>, vector<16x128xbf16>
    %c0_1 = arith.constant 0 : index
    %c0_2 = arith.constant 0 : index
    %1 = vector.load %arg3[%c0_1, %c0_2] : memref<128x128xbf16, #tpu.memory_space<vmem>>, vector<128x128xbf16>
    %cst = arith.constant dense<0.000000e+00> : vector<16x128xf32>
    %2 = tpu.matmul %0, %1, %cst {dimension_numbers = #tpu.dot_dimension_numbers<[1], [0], [0], [1], [0, 0, 1, 1], [], []>} : vector<16x128xbf16>, vector<128x128xbf16>, vector<16x128xf32> -> vector<16x128xf32>
    %c0_3 = arith.constant 0 : index
    %c0_4 = arith.constant 0 : index
    %3 = vector.load %arg4[%c0_3, %c0_4] : memref<1x128xf32, #tpu.memory_space<vmem>>, vector<1x128xf32>
    %4 = vector.broadcast %3 : vector<1x128xf32> to vector<16x128xf32>
    %5 = arith.addf %2, %4 : vector<16x128xf32>
    %cst_5 = arith.constant 5.000000e-01 : f32
    %6 = vector.broadcast %cst_5 : f32 to vector<16x128xf32>
    %7 = arith.mulf %6, %5 : vector<16x128xf32>
    %cst_6 = arith.constant 0.707106769 : f32
    %8 = vector.broadcast %cst_6 : f32 to vector<16x128xf32>
    %9 = arith.mulf %5, %8 : vector<16x128xf32>
    %cst_7 = arith.constant 0.000000e+00 : f32
    %10 = vector.broadcast %cst_7 : f32 to vector<16x128xf32>
    %11 = arith.cmpf oge, %9, %10 : vector<16x128xf32>
    %cst_8 = arith.constant 1.000000e+00 : f32
    %cst_9 = arith.constant -1.000000e+00 : f32
    %12 = vector.broadcast %cst_8 : f32 to vector<16x128xf32>
    %13 = vector.broadcast %cst_9 : f32 to vector<16x128xf32>
    %14 = arith.select %11, %12, %13 : vector<16x128xi1>, vector<16x128xf32>
    %15 = math.absf %9 : vector<16x128xf32>
    %cst_10 = arith.constant 0.327591091 : f32
    %16 = vector.broadcast %cst_10 : f32 to vector<16x128xf32>
    %17 = arith.mulf %16, %15 : vector<16x128xf32>
    %cst_11 = arith.constant 1.000000e+00 : f32
    %18 = vector.broadcast %cst_11 : f32 to vector<16x128xf32>
    %19 = arith.addf %18, %17 : vector<16x128xf32>
    %cst_12 = arith.constant 1.000000e+00 : f32
    %20 = vector.broadcast %cst_12 : f32 to vector<16x128xf32>
    %21 = arith.divf %20, %19 : vector<16x128xf32>
    %cst_13 = arith.constant 1.06140542 : f32
    %22 = vector.broadcast %cst_13 : f32 to vector<16x128xf32>
    %23 = arith.mulf %22, %21 : vector<16x128xf32>
    %cst_14 = arith.constant -1.45315206 : f32
    %24 = vector.broadcast %cst_14 : f32 to vector<16x128xf32>
    %25 = arith.addf %23, %24 : vector<16x128xf32>
    %26 = arith.mulf %25, %21 : vector<16x128xf32>
    %cst_15 = arith.constant 1.42141378 : f32
    %27 = vector.broadcast %cst_15 : f32 to vector<16x128xf32>
    %28 = arith.addf %26, %27 : vector<16x128xf32>
    %29 = arith.mulf %28, %21 : vector<16x128xf32>
    %cst_16 = arith.constant -0.284496725 : f32
    %30 = vector.broadcast %cst_16 : f32 to vector<16x128xf32>
    %31 = arith.addf %29, %30 : vector<16x128xf32>
    %32 = arith.mulf %31, %21 : vector<16x128xf32>
    %cst_17 = arith.constant 0.254829586 : f32
    %33 = vector.broadcast %cst_17 : f32 to vector<16x128xf32>
    %34 = arith.addf %32, %33 : vector<16x128xf32>
    %35 = arith.mulf %34, %21 : vector<16x128xf32>
    %cst_18 = arith.constant 0.000000e+00 : f32
    %36 = vector.broadcast %cst_18 : f32 to vector<16x128xf32>
    %37 = arith.subf %36, %15 : vector<16x128xf32>
    %38 = arith.mulf %37, %15 : vector<16x128xf32>
    %39 = math.exp %38 : vector<16x128xf32>
    %40 = arith.mulf %35, %39 : vector<16x128xf32>
    %cst_19 = arith.constant 1.000000e+00 : f32
    %41 = vector.broadcast %cst_19 : f32 to vector<16x128xf32>
    %42 = arith.subf %41, %40 : vector<16x128xf32>
    %43 = arith.mulf %14, %42 : vector<16x128xf32>
    %cst_20 = arith.constant 1.000000e+00 : f32
    %44 = vector.broadcast %cst_20 : f32 to vector<16x128xf32>
    %45 = arith.addf %44, %43 : vector<16x128xf32>
    %46 = arith.mulf %7, %45 : vector<16x128xf32>
    %47 = arith.truncf %46 : vector<16x128xf32> to vector<16x128xbf16>
    %c0_21 = arith.constant 0 : index
    %c0_22 = arith.constant 0 : index
    %48 = vector.load %arg5[%c0_21, %c0_22] : memref<128x128xbf16, #tpu.memory_space<vmem>>, vector<128x128xbf16>
    %cst_23 = arith.constant dense<0.000000e+00> : vector<16x128xf32>
    %49 = tpu.matmul %47, %48, %cst_23 {dimension_numbers = #tpu.dot_dimension_numbers<[1], [0], [0], [1], [0, 0, 1, 1], [], []>} : vector<16x128xbf16>, vector<128x128xbf16>, vector<16x128xf32> -> vector<16x128xf32>
    %c0_i32 = arith.constant 0 : i32
    %50 = arith.cmpi eq, %arg1, %c0_i32 : i32
    %51 = arith.extui %50 : i1 to i32
    %c0_i32_24 = arith.constant 0 : i32
    %52 = arith.cmpi ne, %51, %c0_i32_24 : i32
    scf.if %52 {
      %c0_27 = arith.constant 0 : index
      %c0_28 = arith.constant 0 : index
      %56 = vector.load %arg6[%c0_27, %c0_28] : memref<1x128xf32, #tpu.memory_space<vmem>>, vector<1x128xf32>
      %57 = vector.broadcast %56 : vector<1x128xf32> to vector<16x128xf32>
      %58 = arith.addf %49, %57 : vector<16x128xf32>
      %c0_29 = arith.constant 0 : index
      %c0_30 = arith.constant 0 : index
      %59 = vector.load %arg7[%c0_29, %c0_30] : memref<16x128xf32, #tpu.memory_space<vmem>>, vector<16x128xf32>
      tpu.vector_store %arg7[%c0_29, %c0_30], %58 {strides = array<i32>} : memref<16x128xf32, #tpu.memory_space<vmem>>, vector<16x128xf32>,
    } else {
    }
    %c0_i32_25 = arith.constant 0 : i32
    %53 = arith.cmpi sgt, %arg1, %c0_i32_25 : i32
    %54 = arith.extui %53 : i1 to i32
    %c0_i32_26 = arith.constant 0 : i32
    %55 = arith.cmpi ne, %54, %c0_i32_26 : i32
    scf.if %55 {
      %c0_27 = arith.constant 0 : index
      %c0_28 = arith.constant 0 : index
      %56 = vector.load %arg7[%c0_27, %c0_28] : memref<16x128xf32, #tpu.memory_space<vmem>>, vector<16x128xf32>
      %57 = arith.addf %56, %49 : vector<16x128xf32>
      %c0_29 = arith.constant 0 : index
      %c0_30 = arith.constant 0 : index
      %58 = vector.load %arg7[%c0_29, %c0_30] : memref<16x128xf32, #tpu.memory_space<vmem>>, vector<16x128xf32>
      tpu.vector_store %arg7[%c0_29, %c0_30], %57 {strides = array<i32>} : memref<16x128xf32, #tpu.memory_space<vmem>>, vector<16x128xf32>,
    } else {
    }
    return
  }
  func.func @transform_0(%arg0: i32, %arg1: i32) -> (i32, i32) {
    %c0_i32 = arith.constant 0 : i32
    %c0_i32_0 = arith.constant 0 : i32
    return %arg0, %c0_i32 : i32, i32
  }
  func.func @transform_1(%arg0: i32, %arg1: i32) -> (i32, i32) {
    %c0_i32 = arith.constant 0 : i32
    %c0_i32_0 = arith.constant 0 : i32
    return %c0_i32, %arg1 : i32, i32
  }
  func.func @transform_2(%arg0: i32, %arg1: i32) -> (i32, i32) {
    %c0_i32 = arith.constant 0 : i32
    %c0_i32_0 = arith.constant 0 : i32
    return %c0_i32, %arg1 : i32, i32
  }
  func.func @transform_3(%arg0: i32, %arg1: i32) -> (i32, i32) {
    %c0_i32 = arith.constant 0 : i32
    %c0_i32_0 = arith.constant 0 : i32
    return %arg1, %c0_i32 : i32, i32
  }
  func.func @transform_4(%arg0: i32, %arg1: i32) -> (i32, i32) {
    %c0_i32 = arith.constant 0 : i32
    %c0_i32_0 = arith.constant 0 : i32
    %c0_i32_1 = arith.constant 0 : i32
    return %c0_i32, %c0_i32_0 : i32, i32
  }
  func.func @transform_5(%arg0: i32, %arg1: i32) -> (i32, i32) {
    %c0_i32 = arith.constant 0 : i32
    %c0_i32_0 = arith.constant 0 : i32
    return %arg0, %c0_i32 : i32, i32
  }
}

</mosaic_0001>

<llo_original>
// kernel: tpu_custom_call.1
$region0: #{tpu_custom_call.1}
  #allocation0 [shape = 'u32[]', space=smem, size = 0x4, offset = 0x4, fixed_abs, tag = 'smem constant byte address 0x4 - core index']
  #allocation1 [shape = 'u32[144,128]{1,0:T(1,128)}', space=vmem, size = 0x12000, scoped, tag = 'internal scratch']
  %s0 = inlined_call_operand.hbm [shape: bf16[16,128], index: 0, kind: input, shape index: {}]
  %s1 = inlined_call_operand.hbm [shape: bf16[128,128], index: 1, kind: input, shape index: {}]
  %s2 = inlined_call_operand.vmem [shape: f32[1,128], index: 2, kind: input, shape index: {}]
  %s3 = inlined_call_operand.hbm [shape: bf16[128,128], index: 3, kind: input, shape index: {}]
  %s4 = inlined_call_operand.vmem [shape: f32[1,128], index: 4, kind: input, shape index: {}]
  %s5 = inlined_call_operand.hbm [shape: f32[16,128], index: 5, kind: output, shape index: {}]
  %s6 = sld [smem:[#allocation0]]
  $region50: #{tpu_custom_call.1} parent=0
    _
  %s8 = ssub.s32 1, %s6
  %s9 = scalar_select 0, %s8, %s6
  $region1: #{tpu_custom_call.1} parent=0
    #allocation2 [shape = 'u8[4096]{0}', space=vmem, size = 0x1000, scoped, tag = 'input window, operand 0, single buffered']
    #allocation3 [shape = 's32[1]{0}', space=sflag, size = 0x4, scoped, tag = 'scoped memory for tpu_custom_call.1']
    #allocation4 [shape = 's32[1]{0}', space=sflag, size = 0x4, scoped, tag = 'scoped memory for tpu_custom_call.1']
    #allocation5 [shape = 'u8[32768]{0}', space=vmem, size = 0x8000, scoped, tag = 'input window, operand 1, single buffered']
    #allocation6 [shape = 's32[1]{0}', space=sflag, size = 0x4, scoped, tag = 'scoped memory for tpu_custom_call.1']
    #allocation7 [shape = 'u8[32768]{0}', space=vmem, size = 0x8000, scoped, tag = 'input window, operand 3, single buffered']
    #allocation8 [shape = 'u8[8192]{0}', space=vmem, size = 0x2000, scoped, tag = 'output window, operand 0, single buffered']
    %10 = vsyncpa [#allocation3], 0
    %11 = vsyncpa [#allocation6], 0
    %12 = vsyncpa [#allocation4], 0
    // Predicated region
    $region2: #{tpu_custom_call.1} parent=1 // pred_check
      _
    $region3: #{tpu_custom_call.1} parent=1 // pred_check_branch
      %14 = sbr.rel (0) target = $region5
    $region4: #{tpu_custom_call.1} parent=1 // pred_region
      %s16 = ssub.s32 128, 128
      %17 = vsyncadd [#allocation3], %s16
      %s18 = sshll.u32 [#allocation2], 4
      %s19 = int_to_ptr.vmem [resolvable:$true] %s18
      %24 = dma.hbm_to_vmem [thread:$0]  %s0, 128, %s19, [#allocation3], 64, 64, 4
    $region5: #{tpu_custom_call.1} parent=1 // pred_fallthru
      _
    // Predicated region
    $region6: #{tpu_custom_call.1} parent=1 // pred_check
      _
    $region7: #{tpu_custom_call.1} parent=1 // pred_check_branch
      %26 = sbr.rel (0) target = $region9
    $region8: #{tpu_custom_call.1} parent=1 // pred_region
      %s28 = ssub.s32 1024, 1024
      %29 = vsyncadd [#allocation6], %s28
      %s30 = sshll.u32 [#allocation5], 4
      %s31 = int_to_ptr.vmem [resolvable:$true] %s30
      %36 = dma.hbm_to_vmem [thread:$0]  %s1, 1024, %s31, [#allocation6], 64, 64, 4
    $region9: #{tpu_custom_call.1} parent=1 // pred_fallthru
      _
    // Predicated region
    $region10: #{tpu_custom_call.1} parent=1 // pred_check
      _
    $region11: #{tpu_custom_call.1} parent=1 // pred_check_branch
      %38 = sbr.rel (0) target = $region13
    $region12: #{tpu_custom_call.1} parent=1 // pred_region
      _
    $region13: #{tpu_custom_call.1} parent=1 // pred_fallthru
      _
    // Predicated region
    $region14: #{tpu_custom_call.1} parent=1 // pred_check
      _
    $region15: #{tpu_custom_call.1} parent=1 // pred_check_branch
      %40 = sbr.rel (0) target = $region17
    $region16: #{tpu_custom_call.1} parent=1 // pred_region
      %s42 = ssub.s32 1024, 1024
      %43 = vsyncadd [#allocation6], %s42
      %s44 = sshll.u32 [#allocation7], 4
      %s45 = int_to_ptr.vmem [resolvable:$true] %s44
      %50 = dma.hbm_to_vmem [thread:$0]  %s3, 1024, %s45, [#allocation6], 64, 64, 4
    $region17: #{tpu_custom_call.1} parent=1 // pred_fallthru
      _
    // Predicated region
    $region18: #{tpu_custom_call.1} parent=1 // pred_check
      _
    $region19: #{tpu_custom_call.1} parent=1 // pred_check_branch
      %52 = sbr.rel (0) target = $region21
    $region20: #{tpu_custom_call.1} parent=1 // pred_region
      _
    $region21: #{tpu_custom_call.1} parent=1 // pred_fallthru
      _
    // Predicated region
    $region22: #{tpu_custom_call.1} parent=1 // pred_check
      _
    $region23: #{tpu_custom_call.1} parent=1 // pred_check_branch
      %54 = sbr.rel (0) target = $region25
    $region24: #{tpu_custom_call.1} parent=1 // pred_region
      %55 = dma.done [#allocation3], 128
    $region25: #{tpu_custom_call.1} parent=1 // pred_fallthru
      _
    // Predicated region
    $region26: #{tpu_custom_call.1} parent=1 // pred_check
      _
    $region27: #{tpu_custom_call.1} parent=1 // pred_check_branch
      %57 = sbr.rel (0) target = $region29
    $region28: #{tpu_custom_call.1} parent=1 // pred_region
      %58 = dma.done [#allocation6], 1024
    $region29: #{tpu_custom_call.1} parent=1 // pred_fallthru
      _
    // Predicated region
    $region30: #{tpu_custom_call.1} parent=1 // pred_check
      _
    $region31: #{tpu_custom_call.1} parent=1 // pred_check_branch
      %60 = sbr.rel (0) target = $region33
    $region32: #{tpu_custom_call.1} parent=1 // pred_region
      %61 = dma.done [#allocation6], 1024
    $region33: #{tpu_custom_call.1} parent=1 // pred_fallthru
      _
    %v63 = vld [vmem:[#allocation2] sm:$0xf]
    %v64 = vld [vmem:[#allocation2 + $0x4] sm:$0xf]
    %v65 = vld [vmem:[#allocation5] sm:$0xf]
    %v66 = vld [vmem:[#allocation5 + $0x4] sm:$0xf]
    %v67 = vld [vmem:[#allocation5 + $0x8] sm:$0xf]
    %v68 = vld [vmem:[#allocation5 + $0xc] sm:$0xf]
    %v69 = vld [vmem:[#allocation5 + $0x10] sm:$0xf]
    %v70 = vld [vmem:[#allocation5 + $0x14] sm:$0xf]
    %v71 = vld [vmem:[#allocation5 + $0x18] sm:$0xf]
    %v72 = vld [vmem:[#allocation5 + $0x1c] sm:$0xf]
    %v73 = vld [vmem:[#allocation5 + $0x20] sm:$0xf]
    %v74 = vld [vmem:[#allocation5 + $0x24] sm:$0xf]
    %v75 = vld [vmem:[#allocation5 + $0x28] sm:$0xf]
    %v76 = vld [vmem:[#allocation5 + $0x2c] sm:$0xf]
    %v77 = vld [vmem:[#allocation5 + $0x30] sm:$0xf]
    %v78 = vld [vmem:[#allocation5 + $0x34] sm:$0xf]
    %v79 = vld [vmem:[#allocation5 + $0x38] sm:$0xf]
    %v80 = vld [vmem:[#allocation5 + $0x3c] sm:$0xf]
    %v81 = vld [vmem:[%s2] sm:$0x1]
    %v83 = vlaneseq
    %v84 = vshrl.u32 %v83, 7
    %v85 = vsub.s32 0, %v84
    %v86 = vrot.slane %v81, %v85
    %v90 = vunpack.c.l.b16 %v63
    %v91 = vunpack.c.l.b16 %v64
    %v92 = vpack.c.b16 %v91, %v90
    %v110 = vunpack.c.l.b16 %v65
    %v111 = vunpack.c.l.b16 %v66
    %v112 = vunpack.c.l.b16 %v67
    %v113 = vunpack.c.l.b16 %v68
    %v114 = vunpack.c.l.b16 %v69
    %v115 = vunpack.c.l.b16 %v70
    %v116 = vunpack.c.l.b16 %v71
    %v117 = vunpack.c.l.b16 %v72
    %v118 = vunpack.c.l.b16 %v73
    %v119 = vunpack.c.l.b16 %v74
    %v120 = vunpack.c.l.b16 %v75
    %v121 = vunpack.c.l.b16 %v76
    %v122 = vunpack.c.l.b16 %v77
    %v123 = vunpack.c.l.b16 %v78
    %v124 = vunpack.c.l.b16 %v79
    %v125 = vunpack.c.l.b16 %v80
    %v126 = vpack.c.b16 %v111, %v110
    %v127 = vpack.c.b16 %v113, %v112
    %v128 = vpack.c.b16 %v115, %v114
    %v129 = vpack.c.b16 %v117, %v116
    %v130 = vpack.c.b16 %v119, %v118
    %v131 = vpack.c.b16 %v121, %v120
    %v132 = vpack.c.b16 %v123, %v122
    %v133 = vpack.c.b16 %v125, %v124
    %142 = vmatprep.subr.bf16.mxu0 0
    %143 = vmatpush1.bf16.msra.mxu0 %v133
    %144 = vmatprep.subr.bf16.mxu0 0
    %145 = vmatpush1.bf16.msra.mxu0 %v132
    %146 = vmatprep.subr.bf16.mxu0 0
    %147 = vmatpush1.bf16.msra.mxu0 %v131
    %148 = vmatprep.subr.bf16.mxu0 0
    %149 = vmatpush1.bf16.msra.mxu0 %v130
    %150 = vmatprep.subr.bf16.mxu0 0
    %151 = vmatpush1.bf16.msra.mxu0 %v129
    %152 = vmatprep.subr.bf16.mxu0 0
    %153 = vmatpush1.bf16.msra.mxu0 %v128
    %154 = vmatprep.subr.bf16.mxu0 0
    %155 = vmatpush1.bf16.msra.mxu0 %v127
    %156 = vmatprep.subr.bf16.mxu0 0
    %157 = vmatpush1.bf16.msra.mxu0 %v126
    %158 = vmatprep.subr.bf16.mxu0 0
    %159 = vmatpush2.bf16.msra.mxu0 0
    %160 = vmatprep.subr.bf16.mxu0 0
    %161 = vmatpush2.bf16.msra.mxu0 0
    %162 = vmatprep.subr.bf16.mxu0 0
    %163 = vmatpush2.bf16.msra.mxu0 0
    %164 = vmatprep.subr.bf16.mxu0 0
    %165 = vmatpush2.bf16.msra.mxu0 0
    %166 = vmatprep.subr.bf16.mxu0 0
    %167 = vmatpush2.bf16.msra.mxu0 0
    %168 = vmatprep.subr.bf16.mxu0 0
    %169 = vmatpush2.bf16.msra.mxu0 0
    %170 = vmatprep.subr.bf16.mxu0 0
    %171 = vmatpush2.bf16.msra.mxu0 0
    %172 = vmatprep.subr.bf16.mxu0 0
    %173 = vmatpush2.bf16.msra.mxu0 0
    %174 = vmatprep.mubr.bf16.mxu0 0
    %175 = vmatmul.mubr.bf16.gmra.mxu0 %v92
    %v176 = vpop.f32.mrf.mxu0
    %v177 = vadd.f32 %v86, %v176
    %v178 = vpop.f32.mrf.mxu0
    %v179 = vpop.f32.mrf.mxu0
    %v180 = vadd.f32 %v86, %v179
    %v181 = vpop.f32.mrf.mxu0
    %182 = vdwg.mxu0
    %v183 = vmul.f32 %v177, 0.5
    %v184 = vmul.f32 %v180, 0.5
    %v185 = vmul.f32 %v177, 0.70710677
    %v186 = vmul.f32 %v180, 0.70710677
    %vm187 = vcmp.ge.f32.partialorder %v185, 0.0
    %vm188 = vcmp.ge.f32.partialorder %v186, 0.0
    %v189 = vsel %vm187, 1.0, -1.0
    %v190 = vsel %vm188, 1.0, -1.0
    %v191 = vand.u32 2147483647, %v185
    %v192 = vand.u32 2147483647, %v186
    %v193 = vmul.f32 %v191, 0.3275911
    %v194 = vmul.f32 %v192, 0.3275911
    %v195 = vadd.f32 %v193, 1.0
    %v196 = vadd.f32 %v194, 1.0
    %v197 = vrcp.pop %v195
    %v198 = vmul.f32 1.0, %v197
    %v199 = vrcp.pop %v196
    %v200 = vmul.f32 1.0, %v199
    %v201 = vmul.f32 %v198, 1.0614054
    %v202 = vmul.f32 %v200, 1.0614054
    %v203 = vadd.f32 %v201, -1.4531521
    %v204 = vadd.f32 %v202, -1.4531521
    %v205 = vmul.f32 %v203, %v198
    %v206 = vmul.f32 %v204, %v200
    %v207 = vadd.f32 %v205, 1.4214138
    %v208 = vadd.f32 %v206, 1.4214138
    %v209 = vmul.f32 %v207, %v198
    %v210 = vmul.f32 %v208, %v200
    %v211 = vadd.f32 %v209, -0.28449672
    %v212 = vadd.f32 %v210, -0.28449672
    %v213 = vmul.f32 %v211, %v198
    %v214 = vmul.f32 %v212, %v200
    %v215 = vadd.f32 %v213, 0.2548296
    %v216 = vadd.f32 %v214, 0.2548296
    %v217 = vmul.f32 %v215, %v198
    %v218 = vmul.f32 %v216, %v200
    %v219 = vsub.f32 0.0, %v191
    %v220 = vsub.f32 0.0, %v192
    %v221 = vmul.f32 %v219, %v191
    %v222 = vmul.f32 %v220, %v192
    %v223 = vmul.f32 %v221, 1.442695
    %v224 = vpow.pop %v223
    %v225 = vmul.f32 %v222, 1.442695
    %v226 = vpow.pop %v225
    %v227 = vmul.f32 %v217, %v224
    %v228 = vmul.f32 %v218, %v226
    %v229 = vsub.f32 1.0, %v227
    %v230 = vsub.f32 1.0, %v228
    %v231 = vmul.f32 %v189, %v229
    %v232 = vmul.f32 %v190, %v230
    %v233 = vadd.f32 %v231, 1.0
    %v234 = vadd.f32 %v232, 1.0
    %v235 = vmul.f32 %v183, %v233
    %v236 = vmul.f32 %v184, %v234
    %v237 = vpack.c.bf16 %v236, %v235
    %v238 = vld [vmem:[#allocation7] sm:$0xf]
    %v239 = vld [vmem:[#allocation7 + $0x4] sm:$0xf]
    %v240 = vld [vmem:[#allocation7 + $0x8] sm:$0xf]
    %v241 = vld [vmem:[#allocation7 + $0xc] sm:$0xf]
    %v242 = vld [vmem:[#allocation7 + $0x10] sm:$0xf]
    %v243 = vld [vmem:[#allocation7 + $0x14] sm:$0xf]
    %v244 = vld [vmem:[#allocation7 + $0x18] sm:$0xf]
    %v245 = vld [vmem:[#allocation7 + $0x1c] sm:$0xf]
    %v246 = vld [vmem:[#allocation7 + $0x20] sm:$0xf]
    %v247 = vld [vmem:[#allocation7 + $0x24] sm:$0xf]
    %v248 = vld [vmem:[#allocation7 + $0x28] sm:$0xf]
    %v249 = vld [vmem:[#allocation7 + $0x2c] sm:$0xf]
    %v250 = vld [vmem:[#allocation7 + $0x30] sm:$0xf]
    %v251 = vld [vmem:[#allocation7 + $0x34] sm:$0xf]
    %v252 = vld [vmem:[#allocation7 + $0x38] sm:$0xf]
    %v253 = vld [vmem:[#allocation7 + $0x3c] sm:$0xf]
    %v270 = vunpack.c.l.b16 %v238
    %v271 = vunpack.c.l.b16 %v239
    %v272 = vunpack.c.l.b16 %v240
    %v273 = vunpack.c.l.b16 %v241
    %v274 = vunpack.c.l.b16 %v242
    %v275 = vunpack.c.l.b16 %v243
    %v276 = vunpack.c.l.b16 %v244
    %v277 = vunpack.c.l.b16 %v245
    %v278 = vunpack.c.l.b16 %v246
    %v279 = vunpack.c.l.b16 %v247
    %v280 = vunpack.c.l.b16 %v248
    %v281 = vunpack.c.l.b16 %v249
    %v282 = vunpack.c.l.b16 %v250
    %v283 = vunpack.c.l.b16 %v251
    %v284 = vunpack.c.l.b16 %v252
    %v285 = vunpack.c.l.b16 %v253
    %v286 = vpack.c.b16 %v271, %v270
    %v287 = vpack.c.b16 %v273, %v272
    %v288 = vpack.c.b16 %v275, %v274
    %v289 = vpack.c.b16 %v277, %v276
    %v290 = vpack.c.b16 %v279, %v278
    %v291 = vpack.c.b16 %v281, %v280
    %v292 = vpack.c.b16 %v283, %v282
    %v293 = vpack.c.b16 %v285, %v284
    %302 = vmatprep.subr.bf16.mxu0 0
    %303 = vmatpush1.bf16.msra.mxu0 %v293
    %304 = vmatprep.subr.bf16.mxu0 0
    %305 = vmatpush1.bf16.msra.mxu0 %v292
    %306 = vmatprep.subr.bf16.mxu0 0
    %307 = vmatpush1.bf16.msra.mxu0 %v291
    %308 = vmatprep.subr.bf16.mxu0 0
    %309 = vmatpush1.bf16.msra.mxu0 %v290
    %310 = vmatprep.subr.bf16.mxu0 0
    %311 = vmatpush1.bf16.msra.mxu0 %v289
    %312 = vmatprep.subr.bf16.mxu0 0
    %313 = vmatpush1.bf16.msra.mxu0 %v288
    %314 = vmatprep.subr.bf16.mxu0 0
    %315 = vmatpush1.bf16.msra.mxu0 %v287
    %316 = vmatprep.subr.bf16.mxu0 0
    %317 = vmatpush1.bf16.msra.mxu0 %v286
    %318 = vmatprep.subr.bf16.mxu0 0
    %319 = vmatpush2.bf16.msra.mxu0 0
    %320 = vmatprep.subr.bf16.mxu0 0
    %321 = vmatpush2.bf16.msra.mxu0 0
    %322 = vmatprep.subr.bf16.mxu0 0
    %323 = vmatpush2.bf16.msra.mxu0 0
    %324 = vmatprep.subr.bf16.mxu0 0
    %325 = vmatpush2.bf16.msra.mxu0 0
    %326 = vmatprep.subr.bf16.mxu0 0
    %327 = vmatpush2.bf16.msra.mxu0 0
    %328 = vmatprep.subr.bf16.mxu0 0
    %329 = vmatpush2.bf16.msra.mxu0 0
    %330 = vmatprep.subr.bf16.mxu0 0
    %331 = vmatpush2.bf16.msra.mxu0 0
    %332 = vmatprep.subr.bf16.mxu0 0
    %333 = vmatpush2.bf16.msra.mxu0 0
    %334 = vmatprep.mubr.bf16.mxu0 0
    %335 = vmatmul.mubr.bf16.gmra.mxu0 %v237
    %v336 = vpop.f32.mrf.mxu0
    %v337 = vadd.f32 0.0, %v336
    %v338 = vpop.f32.mrf.mxu0
    %v339 = vpop.f32.mrf.mxu0
    %v340 = vadd.f32 0.0, %v339
    %v341 = vpop.f32.mrf.mxu0
    %342 = vdwg.mxu0
    %p343 = scmp.eq.s32.totalorder 0, 0
    // Predicated region
    $region34: #{tpu_custom_call.1} parent=1 // pred_check
      %p344 = pneg %p343
    $region35: #{tpu_custom_call.1} parent=1 // pred_check_branch
      %346 = sbr.rel (%p344) target = $region37
    $region36: #{tpu_custom_call.1} parent=1 // pred_region
      %v347 = vld [vmem:[%s4] sm:$0x1]
      %v349 = vlaneseq
      %v350 = vshrl.u32 %v349, 7
      %v351 = vsub.s32 0, %v350
      %v352 = vrot.slane %v347, %v351
      %v354 = vadd.f32 %v337, %v352
      %v355 = vadd.f32 %v340, %v352
      %356 = vst [vmem:[#allocation8] sm:$0xff] %v354
      %357 = vst [vmem:[#allocation8 + $0x8] sm:$0xff] %v355
    $region37: #{tpu_custom_call.1} parent=1 // pred_fallthru
      _
    %p358 = scmp.gt.s32.totalorder 0, 0
    // Predicated region
    $region38: #{tpu_custom_call.1} parent=1 // pred_check
      %p359 = pneg %p358
    $region39: #{tpu_custom_call.1} parent=1 // pred_check_branch
      %361 = sbr.rel (%p359) target = $region41
    $region40: #{tpu_custom_call.1} parent=1 // pred_region
      %v362 = vld [vmem:[#allocation8] sm:$0xff]
      %v363 = vld [vmem:[#allocation8 + $0x8] sm:$0xff]
      %v364 = vadd.f32 %v362, %v337
      %v365 = vadd.f32 %v363, %v340
      %366 = vst [vmem:[#allocation8] sm:$0xff] %v364
      %367 = vst [vmem:[#allocation8 + $0x8] sm:$0xff] %v365
    $region41: #{tpu_custom_call.1} parent=1 // pred_fallthru
      _
    // Predicated region
    $region42: #{tpu_custom_call.1} parent=1 // pred_check
      _
    $region43: #{tpu_custom_call.1} parent=1 // pred_check_branch
      %369 = sbr.rel (0) target = $region45
    $region44: #{tpu_custom_call.1} parent=1 // pred_region
      %s371 = ssub.s32 256, 256
      %372 = vsyncadd [#allocation4], %s371
      %s373 = sshll.u32 [#allocation8], 4
      %s374 = int_to_ptr.vmem [resolvable:$true] %s373
      %379 = dma.vmem_to_hbm [thread:$0]  %s374, 256, %s5, [#allocation4], 128, 128, 8
    $region45: #{tpu_custom_call.1} parent=1 // pred_fallthru
      _
    // Predicated region
    $region46: #{tpu_custom_call.1} parent=1 // pred_check
      _
    $region47: #{tpu_custom_call.1} parent=1 // pred_check_branch
      %381 = sbr.rel (0) target = $region49
    $region48: #{tpu_custom_call.1} parent=1 // pred_region
      %382 = dma.done [#allocation4], 256
    $region49: #{tpu_custom_call.1} parent=1 // pred_fallthru
      _
    %383 = vsyncpa [#allocation3], 1
    %384 = vsyncpa [#allocation6], 1
    %385 = vsyncpa [#allocation4], 1

</llo_original>
